<compile_context>
chip_gen: v6e
topology: v6e:2x2x1
jax: 0.10.0
libtpu: 0.0.40
codegen_flags: <defaults>
</compile_context>

<pallas_src>
import jax
import jax.numpy as jnp
from jax.experimental import pallas as pl
from jax.experimental.pallas import tpu as pltpu

# ----- problem sizes (small, consistent with the module) --------------------
B, CIN, NKEYS, H, W = 2, 4, 8, 16, 16
KS, PAD = 3, 1
HW = H * W                   # 256  (lane-dense per batch element)
K2 = CIN * KS * KS           # 36   (im2col contraction dim per conv)
KTOT = 3 * K2                # 108  (fused contraction dim)
NQKV = 3 * NKEYS             # 24   (fused output channels: q|k|v)
FTDEPTH = 5
SMOOTH = 1e-5
BN_EPS = 1e-5
NPAR = 16                    # packed-params lane width


# ----- Pallas kernel: whole forward (all batches) in one invocation ---------
def relft_kernel(x_ref, w_ref, par_ref, out_ref):
    par = par_ref[...]                              # (NQKV, NPAR) f32
    bias = par[:, 0:1]                              # (24,1) conv+BN shift
    so_half = par[0:NKEYS, 1:2]                     # (8,1)  0.5 * final BN scale
    bo = par[0:NKEYS, 2:3]                          # (8,1)  final BN shift
    a_col = par[0:2 * FTDEPTH, 3:4]                 # (10,1) [1,2,4,8,16]*2
    b_col = par[0:2 * FTDEPTH, 4:5]                 # (10,1) 1-2a
    sel_col = par[0:2 * FTDEPTH, 5:6]               # (10,1) [0]*5+[1]*5
    a_row = par[10:11, 6:6 + 2 * FTDEPTH]           # (1,10)
    b_row = par[11:12, 6:6 + 2 * FTDEPTH]           # (1,10)
    sel_row = par[12:13, 6:6 + 2 * FTDEPTH]         # (1,10)

    # One block-diagonal matmul does all three convs for both batch elements:
    # (24,108)bf16 @ (108,512)bf16 -> (24,512)f32.
    y = jnp.dot(w_ref[...], x_ref[...], preferred_element_type=jnp.float32)
    y = y + bias
    qkv = 0.5 * (1.0 + jnp.tanh(0.5 * y))           # sigmoid via one EUP tanh

    q = qkv[0:NKEYS, :]                             # (8,512)  sublane-aligned
    k = qkv[NKEYS:2 * NKEYS, :]
    v = qkv[2 * NKEYS:3 * NKEYS, :]
    pq = q * k                                      # only the sums are needed
    s2 = q * q + k * k

    scale_ft = 0.5 / FTDEPTH

    # ---- spatial metric (FT over the channel axis); batch-safe on 512 lanes
    t_sp = jnp.sum(pq, axis=0, keepdims=True)       # (1,512) tpl
    s_sp = jnp.sum(s2, axis=0, keepdims=True)       #         tpp + tll
    off_sp = (float(NKEYS)
              - jnp.sum(q, axis=0, keepdims=True)
              - jnp.sum(k, axis=0, keepdims=True))  # complement offset
    den_sp = a_col * s_sp + b_col * t_sp + sel_col * off_sp + SMOOTH  # (10,512)
    rec_sp = pl.reciprocal(den_sp)                  # one exact batched recip
    db_sp = jnp.sum(rec_sp[0:FTDEPTH, :], axis=0, keepdims=True)
    dc_sp = jnp.sum(rec_sp[FTDEPTH:, :], axis=0, keepdims=True)
    att_spat = scale_ft * ((t_sp + SMOOTH) * db_sp
                           + (t_sp + off_sp + SMOOTH) * dc_sp)        # (1,512)

    # ---- channel metric (FT over H*W, per batch element) + combine ---------
    for bi in range(B):
        c = slice(bi * HW, (bi + 1) * HW)           # static, 128-aligned
        t_ch = jnp.sum(pq[:, c], axis=1, keepdims=True)               # (8,1)
        s_ch = jnp.sum(s2[:, c], axis=1, keepdims=True)
        off_ch = (float(HW)
                  - jnp.sum(q[:, c], axis=1, keepdims=True)
                  - jnp.sum(k[:, c], axis=1, keepdims=True))
        den_ch = a_row * s_ch + b_row * t_ch + sel_row * off_ch + SMOOTH  # (8,10)
        rec_ch = pl.reciprocal(den_ch)              # one exact batched recip
        db_ch = jnp.sum(rec_ch[:, 0:FTDEPTH], axis=1, keepdims=True)
        dc_ch = jnp.sum(rec_ch[:, FTDEPTH:], axis=1, keepdims=True)
        att_chan = scale_ft * ((t_ch + SMOOTH) * db_ch
                               + (t_ch + off_ch + SMOOTH) * dc_ch)    # (8,1)

        vb = v[:, c]                                                  # (8,256)
        out_b = (att_chan * vb) * (att_spat[:, c] * vb)
        out_ref[bi, :, :] = out_b * so_half + bo    # final BN (0.5 folded in)


# ----- wrapper: im2col / packing / BN folding in plain JAX -------------------
def _im2col(x):
    xp = jnp.pad(x, ((0, 0), (0, 0), (PAD, PAD), (PAD, PAD)))
    cols = [xp[:, :, di:di + H, dj:dj + W]
            for di in range(KS) for dj in range(KS)]   # c-major, di*3+dj minor
    xc = jnp.stack(cols, axis=2)                       # (B, CIN, 9, H, W)
    return xc.reshape(B, K2, HW)                       # (B, 36, 256)


def _pack_inputs(x1, x2, x3):
    xc = jnp.concatenate([_im2col(x1), _im2col(x2), _im2col(x3)], axis=1)
    xc = jnp.transpose(xc, (1, 0, 2)).reshape(KTOT, B * HW)   # (108, 512)
    return xc.astype(jnp.bfloat16)


def _pack_weights(p):
    wq = p["sq"] * p["wq"].reshape(NKEYS, K2)          # BN scale folded in
    wk = p["sk"] * p["wk"].reshape(NKEYS, K2)
    wv = p["sv"] * p["wv"].reshape(NKEYS, K2)
    w_bd = jnp.zeros((NQKV, KTOT), jnp.float32)
    w_bd = w_bd.at[0:NKEYS, 0:K2].set(wq)
    w_bd = w_bd.at[NKEYS:2 * NKEYS, K2:2 * K2].set(wk)
    w_bd = w_bd.at[2 * NKEYS:, 2 * K2:].set(wv)
    return w_bd.astype(jnp.bfloat16)


def _pack_params(p):
    a_vals = jnp.array([2.0 ** d for d in range(FTDEPTH)] * 2, jnp.float32)
    b_vals = 1.0 - 2.0 * a_vals
    sel = jnp.array([0.0] * FTDEPTH + [1.0] * FTDEPTH, jnp.float32)
    par = jnp.zeros((NQKV, NPAR), jnp.float32)
    par = par.at[:, 0].set(
        jnp.concatenate([p["bq"], p["bk"], p["bv"]], axis=0)[:, 0])
    par = par.at[0:NKEYS, 1].set(0.5 * p["so"][:, 0])   # fold the 0.5 factor
    par = par.at[0:NKEYS, 2].set(p["bo"][:, 0])
    par = par.at[0:2 * FTDEPTH, 3].set(a_vals)
    par = par.at[0:2 * FTDEPTH, 4].set(b_vals)
    par = par.at[0:2 * FTDEPTH, 5].set(sel)
    par = par.at[10, 6:6 + 2 * FTDEPTH].set(a_vals)
    par = par.at[11, 6:6 + 2 * FTDEPTH].set(b_vals)
    par = par.at[12, 6:6 + 2 * FTDEPTH].set(sel)
    return par


@jax.jit
def relft_attention_2d(x1, x2, x3, p):
    xc = _pack_inputs(x1, x2, x3)        # (108, 512) bf16
    w_bd = _pack_weights(p)              # (24, 108)  bf16 block-diagonal
    par = _pack_params(p)                # (24, 16)   f32

    vmem = pltpu.MemorySpace.VMEM
    out = pl.pallas_call(
        relft_kernel,
        out_shape=jax.ShapeDtypeStruct((B, NKEYS, HW), jnp.float32),
        in_specs=[pl.BlockSpec(memory_space=vmem),
                  pl.BlockSpec(memory_space=vmem),
                  pl.BlockSpec(memory_space=vmem)],
        out_specs=pl.BlockSpec(memory_space=vmem),
    )(xc, w_bd, par)
    return out.reshape(B, NKEYS, H, W)


# ----- deterministic parameter construction ----------------------------------
def make_params(key):
    ks = jax.random.split(key, 16)

    def conv_bn_fold(kw, kb, kg, kbeta):
        fan_in = CIN * KS * KS
        bound = 1.0 / (fan_in ** 0.5)
        w = jax.random.uniform(kw, (NKEYS, CIN, KS, KS), jnp.float32,
                               -bound, bound)
        bias = jax.random.uniform(kb, (NKEYS,), jnp.float32, -bound, bound)
        gamma = jax.random.uniform(kg, (NKEYS,), jnp.float32, 0.5, 1.5)
        beta = jax.random.uniform(kbeta, (NKEYS,), jnp.float32, -0.1, 0.1)
        mean = jnp.zeros((NKEYS,), jnp.float32)    # running stats (defaults)
        var = jnp.ones((NKEYS,), jnp.float32)
        scale = gamma / jnp.sqrt(var + BN_EPS)
        shift = scale * (bias - mean) + beta
        return w, scale.reshape(NKEYS, 1), shift.reshape(NKEYS, 1)

    wq, sq, bq = conv_bn_fold(ks[0], ks[1], ks[2], ks[3])
    wk, sk, bk = conv_bn_fold(ks[4], ks[5], ks[6], ks[7])
    wv, sv, bv = conv_bn_fold(ks[8], ks[9], ks[10], ks[11])

    gamma_o = jax.random.uniform(ks[12], (NKEYS,), jnp.float32, 0.5, 1.5)
    beta_o = jax.random.uniform(ks[13], (NKEYS,), jnp.float32, -0.1, 0.1)
    so = (gamma_o / jnp.sqrt(1.0 + BN_EPS)).reshape(NKEYS, 1)
    bo = beta_o.reshape(NKEYS, 1)

    return dict(wq=wq, sq=sq, bq=bq, wk=wk, sk=sk, bk=bk,
                wv=wv, sv=sv, bv=bv, so=so, bo=bo)


# ----- pure-JAX reference for validation --------------------------------------
def _ft_metric_ref(p, l, axis):
    def base(pp, ll):
        tpl = jnp.sum(pp * ll, axis=axis, keepdims=True)
        tpp = jnp.sum(pp * pp, axis=axis, keepdims=True)
        tll = jnp.sum(ll * ll, axis=axis, keepdims=True)
        num = tpl + SMOOTH
        denum = 0.0
        for d in range(FTDEPTH):
            a = 2.0 ** d
            b = -(2.0 * a - 1.0)
            denum = denum + 1.0 / (a * (tpp + tll) + b * tpl + SMOOTH)
        return num * denum * (1.0 / FTDEPTH)

    return 0.5 * (base(p, l) + base(1.0 - p, 1.0 - l))


def relft_reference(x1, x2, x3, p):
    def conv_bn_sig(x, w, s, b):
        y = jax.lax.conv_general_dilated(
            x, w, window_strides=(1, 1),
            padding=((PAD, PAD), (PAD, PAD)),
            dimension_numbers=("NCHW", "OIHW", "NCHW"),
            precision=jax.lax.Precision.HIGHEST)
        y = y * s.reshape(1, NKEYS, 1, 1) + b.reshape(1, NKEYS, 1, 1)
        return jax.nn.sigmoid(y)

    q = conv_bn_sig(x1, p["wq"], p["sq"], p["bq"])
    k = conv_bn_sig(x2, p["wk"], p["sk"], p["bk"])
    v = conv_bn_sig(x3, p["wv"], p["sv"], p["bv"])

    att_spat = _ft_metric_ref(q, k, axis=1)        # (B, 1, H, W)
    att_chan = _ft_metric_ref(q, k, axis=(2, 3))   # (B, C, 1, 1)
    v_cspat = 0.5 * (att_chan * v) * (att_spat * v)
    return v_cspat * p["so"].reshape(1, NKEYS, 1, 1) + \
        p["bo"].reshape(1, NKEYS, 1, 1)


if __name__ == "__main__":
    key = jax.random.PRNGKey(0)
    k0, k1, k2_, k3 = jax.random.split(key, 4)
    x1 = jax.random.normal(k0, (B, CIN, H, W), jnp.float32)
    x2 = jax.random.normal(k1, (B, CIN, H, W), jnp.float32)
    x3 = jax.random.normal(k2_, (B, CIN, H, W), jnp.float32)
    params = make_params(k3)

    out = jax.block_until_ready(relft_attention_2d(x1, x2, x3, params))
    ref = jax.block_until_ready(relft_reference(x1, x2, x3, params))

    max_err = float(jnp.max(jnp.abs(out - ref)))
    assert out.shape == (B, NKEYS, H, W)
    assert max_err < 2e-2, f"mismatch vs reference: {max_err}"

    print("KERNEL_OK")
</pallas_src>

<mosaic_0001>
module attributes {stable_mosaic.version = 11 : i64} {
  func.func @relft_kernel(%arg0: memref<108x512xbf16, #tpu.memory_space<vmem>>, %arg1: memref<24x108xbf16, #tpu.memory_space<vmem>>, %arg2: memref<24x16xf32, #tpu.memory_space<vmem>>, %arg3: memref<2x8x256xf32, #tpu.memory_space<vmem>>) attributes {dimension_semantics = [], scalar_prefetch = 0 : i64, scratch_operands = 0 : i64, tpu.core_type = #tpu.core_type<tc>} {
    %c0 = arith.constant 0 : index
    %c0_0 = arith.constant 0 : index
    %0 = vector.load %arg2[%c0, %c0_0] : memref<24x16xf32, #tpu.memory_space<vmem>>, vector<24x16xf32>
    %1 = vector.extract_strided_slice %0 {offsets = [0, 0], sizes = [24, 1], strides = [1, 1]} : vector<24x16xf32> to vector<24x1xf32>
    %2 = vector.extract_strided_slice %0 {offsets = [0, 1], sizes = [8, 1], strides = [1, 1]} : vector<24x16xf32> to vector<8x1xf32>
    %3 = vector.extract_strided_slice %0 {offsets = [0, 2], sizes = [8, 1], strides = [1, 1]} : vector<24x16xf32> to vector<8x1xf32>
    %4 = vector.extract_strided_slice %0 {offsets = [0, 3], sizes = [10, 1], strides = [1, 1]} : vector<24x16xf32> to vector<10x1xf32>
    %5 = vector.extract_strided_slice %0 {offsets = [0, 4], sizes = [10, 1], strides = [1, 1]} : vector<24x16xf32> to vector<10x1xf32>
    %6 = vector.extract_strided_slice %0 {offsets = [0, 5], sizes = [10, 1], strides = [1, 1]} : vector<24x16xf32> to vector<10x1xf32>
    %7 = vector.extract_strided_slice %0 {offsets = [10, 6], sizes = [1, 10], strides = [1, 1]} : vector<24x16xf32> to vector<1x10xf32>
    %8 = vector.extract_strided_slice %0 {offsets = [11, 6], sizes = [1, 10], strides = [1, 1]} : vector<24x16xf32> to vector<1x10xf32>
    %9 = vector.extract_strided_slice %0 {offsets = [12, 6], sizes = [1, 10], strides = [1, 1]} : vector<24x16xf32> to vector<1x10xf32>
    %c0_1 = arith.constant 0 : index
    %c0_2 = arith.constant 0 : index
    %10 = vector.load %arg1[%c0_1, %c0_2] : memref<24x108xbf16, #tpu.memory_space<vmem>>, vector<24x108xbf16>
    %c0_3 = arith.constant 0 : index
    %c0_4 = arith.constant 0 : index
    %11 = vector.load %arg0[%c0_3, %c0_4] : memref<108x512xbf16, #tpu.memory_space<vmem>>, vector<108x512xbf16>
    %cst = arith.constant dense<0.000000e+00> : vector<24x512xf32>
    %12 = tpu.matmul %10, %11, %cst {dimension_numbers = #tpu.dot_dimension_numbers<[1], [0], [0], [1], [0, 0, 1, 1], [], []>} : vector<24x108xbf16>, vector<108x512xbf16>, vector<24x512xf32> -> vector<24x512xf32>
    %13 = vector.broadcast %1 : vector<24x1xf32> to vector<24x512xf32>
    %14 = arith.addf %12, %13 : vector<24x512xf32>
    %cst_5 = arith.constant 5.000000e-01 : f32
    %15 = vector.broadcast %cst_5 : f32 to vector<24x512xf32>
    %16 = arith.mulf %15, %14 : vector<24x512xf32>
    %17 = math.tanh %16 : vector<24x512xf32>
    %cst_6 = arith.constant 1.000000e+00 : f32
    %18 = vector.broadcast %cst_6 : f32 to vector<24x512xf32>
    %19 = arith.addf %18, %17 : vector<24x512xf32>
    %cst_7 = arith.constant 5.000000e-01 : f32
    %20 = vector.broadcast %cst_7 : f32 to vector<24x512xf32>
    %21 = arith.mulf %20, %19 : vector<24x512xf32>
    %22 = vector.extract_strided_slice %21 {offsets = [0, 0], sizes = [8, 512], strides = [1, 1]} : vector<24x512xf32> to vector<8x512xf32>
    %23 = vector.extract_strided_slice %21 {offsets = [8, 0], sizes = [8, 512], strides = [1, 1]} : vector<24x512xf32> to vector<8x512xf32>
    %24 = vector.extract_strided_slice %21 {offsets = [16, 0], sizes = [8, 512], strides = [1, 1]} : vector<24x512xf32> to vector<8x512xf32>
    %25 = arith.mulf %22, %23 : vector<8x512xf32>
    %26 = arith.mulf %22, %22 : vector<8x512xf32>
    %27 = arith.mulf %23, %23 : vector<8x512xf32>
    %28 = arith.addf %26, %27 : vector<8x512xf32>
    %cst_8 = arith.constant dense<0.000000e+00> : vector<512xf32>
    %29 = vector.multi_reduction <add>, %25, %cst_8 [0] : vector<8x512xf32> to vector<512xf32>
    %30 = vector.shape_cast %29 : vector<512xf32> to vector<1x512xf32>
    %cst_9 = arith.constant dense<0.000000e+00> : vector<512xf32>
    %31 = vector.multi_reduction <add>, %28, %cst_9 [0] : vector<8x512xf32> to vector<512xf32>
    %32 = vector.shape_cast %31 : vector<512xf32> to vector<1x512xf32>
    %cst_10 = arith.constant dense<0.000000e+00> : vector<512xf32>
    %33 = vector.multi_reduction <add>, %22, %cst_10 [0] : vector<8x512xf32> to vector<512xf32>
    %34 = vector.shape_cast %33 : vector<512xf32> to vector<1x512xf32>
    %cst_11 = arith.constant 8.000000e+00 : f32
    %35 = vector.broadcast %cst_11 : f32 to vector<1x512xf32>
    %36 = arith.subf %35, %34 : vector<1x512xf32>
    %cst_12 = arith.constant dense<0.000000e+00> : vector<512xf32>
    %37 = vector.multi_reduction <add>, %23, %cst_12 [0] : vector<8x512xf32> to vector<512xf32>
    %38 = vector.shape_cast %37 : vector<512xf32> to vector<1x512xf32>
    %39 = arith.subf %36, %38 : vector<1x512xf32>
    %40 = vector.broadcast %4 : vector<10x1xf32> to vector<10x512xf32>
    %41 = vector.broadcast %32 : vector<1x512xf32> to vector<10x512xf32>
    %42 = arith.mulf %40, %41 : vector<10x512xf32>
    %43 = vector.broadcast %5 : vector<10x1xf32> to vector<10x512xf32>
    %44 = vector.broadcast %30 : vector<1x512xf32> to vector<10x512xf32>
    %45 = arith.mulf %43, %44 : vector<10x512xf32>
    %46 = arith.addf %42, %45 : vector<10x512xf32>
    %47 = vector.broadcast %6 : vector<10x1xf32> to vector<10x512xf32>
    %48 = vector.broadcast %39 : vector<1x512xf32> to vector<10x512xf32>
    %49 = arith.mulf %47, %48 : vector<10x512xf32>
    %50 = arith.addf %46, %49 : vector<10x512xf32>
    %cst_13 = arith.constant 9.99999974E-6 : f32
    %51 = vector.broadcast %cst_13 : f32 to vector<10x512xf32>
    %52 = arith.addf %50, %51 : vector<10x512xf32>
    %53 = tpu.reciprocal %52 : vector<10x512xf32> -> vector<10x512xf32>
    %54 = vector.extract_strided_slice %53 {offsets = [0, 0], sizes = [5, 512], strides = [1, 1]} : vector<10x512xf32> to vector<5x512xf32>
    %cst_14 = arith.constant dense<0.000000e+00> : vector<512xf32>
    %55 = vector.multi_reduction <add>, %54, %cst_14 [0] : vector<5x512xf32> to vector<512xf32>
    %56 = vector.shape_cast %55 : vector<512xf32> to vector<1x512xf32>
    %57 = vector.extract_strided_slice %53 {offsets = [5, 0], sizes = [5, 512], strides = [1, 1]} : vector<10x512xf32> to vector<5x512xf32>
    %cst_15 = arith.constant dense<0.000000e+00> : vector<512xf32>
    %58 = vector.multi_reduction <add>, %57, %cst_15 [0] : vector<5x512xf32> to vector<512xf32>
    %59 = vector.shape_cast %58 : vector<512xf32> to vector<1x512xf32>
    %cst_16 = arith.constant 9.99999974E-6 : f32
    %60 = vector.broadcast %cst_16 : f32 to vector<1x512xf32>
    %61 = arith.addf %30, %60 : vector<1x512xf32>
    %62 = arith.mulf %61, %56 : vector<1x512xf32>
    %63 = arith.addf %30, %39 : vector<1x512xf32>
    %cst_17 = arith.constant 9.99999974E-6 : f32
    %64 = vector.broadcast %cst_17 : f32 to vector<1x512xf32>
    %65 = arith.addf %63, %64 : vector<1x512xf32>
    %66 = arith.mulf %65, %59 : vector<1x512xf32>
    %67 = arith.addf %62, %66 : vector<1x512xf32>
    %cst_18 = arith.constant 1.000000e-01 : f32
    %68 = vector.broadcast %cst_18 : f32 to vector<1x512xf32>
    %69 = arith.mulf %68, %67 : vector<1x512xf32>
    %70 = vector.extract_strided_slice %25 {offsets = [0, 0], sizes = [8, 256], strides = [1, 1]} : vector<8x512xf32> to vector<8x256xf32>
    %cst_19 = arith.constant dense<0.000000e+00> : vector<8xf32>
    %71 = vector.multi_reduction <add>, %70, %cst_19 [1] : vector<8x256xf32> to vector<8xf32>
    %72 = vector.shape_cast %71 : vector<8xf32> to vector<8x1xf32>
    %73 = vector.extract_strided_slice %28 {offsets = [0, 0], sizes = [8, 256], strides = [1, 1]} : vector<8x512xf32> to vector<8x256xf32>
    %cst_20 = arith.constant dense<0.000000e+00> : vector<8xf32>
    %74 = vector.multi_reduction <add>, %73, %cst_20 [1] : vector<8x256xf32> to vector<8xf32>
    %75 = vector.shape_cast %74 : vector<8xf32> to vector<8x1xf32>
    %76 = vector.extract_strided_slice %22 {offsets = [0, 0], sizes = [8, 256], strides = [1, 1]} : vector<8x512xf32> to vector<8x256xf32>
    %cst_21 = arith.constant dense<0.000000e+00> : vector<8xf32>
    %77 = vector.multi_reduction <add>, %76, %cst_21 [1] : vector<8x256xf32> to vector<8xf32>
    %78 = vector.shape_cast %77 : vector<8xf32> to vector<8x1xf32>
    %cst_22 = arith.constant 2.560000e+02 : f32
    %79 = vector.broadcast %cst_22 : f32 to vector<8x1xf32>
    %80 = arith.subf %79, %78 : vector<8x1xf32>
    %81 = vector.extract_strided_slice %23 {offsets = [0, 0], sizes = [8, 256], strides = [1, 1]} : vector<8x512xf32> to vector<8x256xf32>
    %cst_23 = arith.constant dense<0.000000e+00> : vector<8xf32>
    %82 = vector.multi_reduction <add>, %81, %cst_23 [1] : vector<8x256xf32> to vector<8xf32>
    %83 = vector.shape_cast %82 : vector<8xf32> to vector<8x1xf32>
    %84 = arith.subf %80, %83 : vector<8x1xf32>
    %85 = vector.broadcast %7 : vector<1x10xf32> to vector<8x10xf32>
    %86 = vector.broadcast %75 : vector<8x1xf32> to vector<8x10xf32>
    %87 = arith.mulf %85, %86 : vector<8x10xf32>
    %88 = vector.broadcast %8 : vector<1x10xf32> to vector<8x10xf32>
    %89 = vector.broadcast %72 : vector<8x1xf32> to vector<8x10xf32>
    %90 = arith.mulf %88, %89 : vector<8x10xf32>
    %91 = arith.addf %87, %90 : vector<8x10xf32>
    %92 = vector.broadcast %9 : vector<1x10xf32> to vector<8x10xf32>
    %93 = vector.broadcast %84 : vector<8x1xf32> to vector<8x10xf32>
    %94 = arith.mulf %92, %93 : vector<8x10xf32>
    %95 = arith.addf %91, %94 : vector<8x10xf32>
    %cst_24 = arith.constant 9.99999974E-6 : f32
    %96 = vector.broadcast %cst_24 : f32 to vector<8x10xf32>
    %97 = arith.addf %95, %96 : vector<8x10xf32>
    %98 = tpu.reciprocal %97 : vector<8x10xf32> -> vector<8x10xf32>
    %99 = vector.extract_strided_slice %98 {offsets = [0, 0], sizes = [8, 5], strides = [1, 1]} : vector<8x10xf32> to vector<8x5xf32>
    %cst_25 = arith.constant dense<0.000000e+00> : vector<8xf32>
    %100 = vector.multi_reduction <add>, %99, %cst_25 [1] : vector<8x5xf32> to vector<8xf32>
    %101 = vector.shape_cast %100 : vector<8xf32> to vector<8x1xf32>
    %102 = vector.extract_strided_slice %98 {offsets = [0, 5], sizes = [8, 5], strides = [1, 1]} : vector<8x10xf32> to vector<8x5xf32>
    %cst_26 = arith.constant dense<0.000000e+00> : vector<8xf32>
    %103 = vector.multi_reduction <add>, %102, %cst_26 [1] : vector<8x5xf32> to vector<8xf32>
    %104 = vector.shape_cast %103 : vector<8xf32> to vector<8x1xf32>
    %cst_27 = arith.constant 9.99999974E-6 : f32
    %105 = vector.broadcast %cst_27 : f32 to vector<8x1xf32>
    %106 = arith.addf %72, %105 : vector<8x1xf32>
    %107 = arith.mulf %106, %101 : vector<8x1xf32>
    %108 = arith.addf %72, %84 : vector<8x1xf32>
    %cst_28 = arith.constant 9.99999974E-6 : f32
    %109 = vector.broadcast %cst_28 : f32 to vector<8x1xf32>
    %110 = arith.addf %108, %109 : vector<8x1xf32>
    %111 = arith.mulf %110, %104 : vector<8x1xf32>
    %112 = arith.addf %107, %111 : vector<8x1xf32>
    %cst_29 = arith.constant 1.000000e-01 : f32
    %113 = vector.broadcast %cst_29 : f32 to vector<8x1xf32>
    %114 = arith.mulf %113, %112 : vector<8x1xf32>
    %115 = vector.extract_strided_slice %24 {offsets = [0, 0], sizes = [8, 256], strides = [1, 1]} : vector<8x512xf32> to vector<8x256xf32>
    %116 = vector.broadcast %114 : vector<8x1xf32> to vector<8x256xf32>
    %117 = arith.mulf %116, %115 : vector<8x256xf32>
    %118 = vector.extract_strided_slice %69 {offsets = [0, 0], sizes = [1, 256], strides = [1, 1]} : vector<1x512xf32> to vector<1x256xf32>
    %119 = vector.broadcast %118 : vector<1x256xf32> to vector<8x256xf32>
    %120 = arith.mulf %119, %115 : vector<8x256xf32>
    %121 = arith.mulf %117, %120 : vector<8x256xf32>
    %122 = vector.broadcast %2 : vector<8x1xf32> to vector<8x256xf32>
    %123 = arith.mulf %121, %122 : vector<8x256xf32>
    %124 = vector.broadcast %3 : vector<8x1xf32> to vector<8x256xf32>
    %125 = arith.addf %123, %124 : vector<8x256xf32>
    %c0_30 = arith.constant 0 : index
    %c0_31 = arith.constant 0 : index
    %c0_32 = arith.constant 0 : index
    %126 = vector.load %arg3[%c0_30, %c0_31, %c0_32] : memref<2x8x256xf32, #tpu.memory_space<vmem>>, vector<1x8x256xf32>
    %127 = vector.shape_cast %126 : vector<1x8x256xf32> to vector<8x256xf32>
    %128 = vector.shape_cast %125 : vector<8x256xf32> to vector<1x8x256xf32>
    tpu.vector_store %arg3[%c0_30, %c0_31, %c0_32], %128 {strides = array<i32>} : memref<2x8x256xf32, #tpu.memory_space<vmem>>, vector<1x8x256xf32>,
    %129 = vector.extract_strided_slice %25 {offsets = [0, 256], sizes = [8, 256], strides = [1, 1]} : vector<8x512xf32> to vector<8x256xf32>
    %cst_33 = arith.constant dense<0.000000e+00> : vector<8xf32>
    %130 = vector.multi_reduction <add>, %129, %cst_33 [1] : vector<8x256xf32> to vector<8xf32>
    %131 = vector.shape_cast %130 : vector<8xf32> to vector<8x1xf32>
    %132 = vector.extract_strided_slice %28 {offsets = [0, 256], sizes = [8, 256], strides = [1, 1]} : vector<8x512xf32> to vector<8x256xf32>
    %cst_34 = arith.constant dense<0.000000e+00> : vector<8xf32>
    %133 = vector.multi_reduction <add>, %132, %cst_34 [1] : vector<8x256xf32> to vector<8xf32>
    %134 = vector.shape_cast %133 : vector<8xf32> to vector<8x1xf32>
    %135 = vector.extract_strided_slice %22 {offsets = [0, 256], sizes = [8, 256], strides = [1, 1]} : vector<8x512xf32> to vector<8x256xf32>
    %cst_35 = arith.constant dense<0.000000e+00> : vector<8xf32>
    %136 = vector.multi_reduction <add>, %135, %cst_35 [1] : vector<8x256xf32> to vector<8xf32>
    %137 = vector.shape_cast %136 : vector<8xf32> to vector<8x1xf32>
    %cst_36 = arith.constant 2.560000e+02 : f32
    %138 = vector.broadcast %cst_36 : f32 to vector<8x1xf32>
    %139 = arith.subf %138, %137 : vector<8x1xf32>
    %140 = vector.extract_strided_slice %23 {offsets = [0, 256], sizes = [8, 256], strides = [1, 1]} : vector<8x512xf32> to vector<8x256xf32>
    %cst_37 = arith.constant dense<0.000000e+00> : vector<8xf32>
    %141 = vector.multi_reduction <add>, %140, %cst_37 [1] : vector<8x256xf32> to vector<8xf32>
    %142 = vector.shape_cast %141 : vector<8xf32> to vector<8x1xf32>
    %143 = arith.subf %139, %142 : vector<8x1xf32>
    %144 = vector.broadcast %7 : vector<1x10xf32> to vector<8x10xf32>
    %145 = vector.broadcast %134 : vector<8x1xf32> to vector<8x10xf32>
    %146 = arith.mulf %144, %145 : vector<8x10xf32>
    %147 = vector.broadcast %8 : vector<1x10xf32> to vector<8x10xf32>
    %148 = vector.broadcast %131 : vector<8x1xf32> to vector<8x10xf32>
    %149 = arith.mulf %147, %148 : vector<8x10xf32>
    %150 = arith.addf %146, %149 : vector<8x10xf32>
    %151 = vector.broadcast %9 : vector<1x10xf32> to vector<8x10xf32>
    %152 = vector.broadcast %143 : vector<8x1xf32> to vector<8x10xf32>
    %153 = arith.mulf %151, %152 : vector<8x10xf32>
    %154 = arith.addf %150, %153 : vector<8x10xf32>
    %cst_38 = arith.constant 9.99999974E-6 : f32
    %155 = vector.broadcast %cst_38 : f32 to vector<8x10xf32>
    %156 = arith.addf %154, %155 : vector<8x10xf32>
    %157 = tpu.reciprocal %156 : vector<8x10xf32> -> vector<8x10xf32>
    %158 = vector.extract_strided_slice %157 {offsets = [0, 0], sizes = [8, 5], strides = [1, 1]} : vector<8x10xf32> to vector<8x5xf32>
    %cst_39 = arith.constant dense<0.000000e+00> : vector<8xf32>
    %159 = vector.multi_reduction <add>, %158, %cst_39 [1] : vector<8x5xf32> to vector<8xf32>
    %160 = vector.shape_cast %159 : vector<8xf32> to vector<8x1xf32>
    %161 = vector.extract_strided_slice %157 {offsets = [0, 5], sizes = [8, 5], strides = [1, 1]} : vector<8x10xf32> to vector<8x5xf32>
    %cst_40 = arith.constant dense<0.000000e+00> : vector<8xf32>
    %162 = vector.multi_reduction <add>, %161, %cst_40 [1] : vector<8x5xf32> to vector<8xf32>
    %163 = vector.shape_cast %162 : vector<8xf32> to vector<8x1xf32>
    %cst_41 = arith.constant 9.99999974E-6 : f32
    %164 = vector.broadcast %cst_41 : f32 to vector<8x1xf32>
    %165 = arith.addf %131, %164 : vector<8x1xf32>
    %166 = arith.mulf %165, %160 : vector<8x1xf32>
    %167 = arith.addf %131, %143 : vector<8x1xf32>
    %cst_42 = arith.constant 9.99999974E-6 : f32
    %168 = vector.broadcast %cst_42 : f32 to vector<8x1xf32>
    %169 = arith.addf %167, %168 : vector<8x1xf32>
    %170 = arith.mulf %169, %163 : vector<8x1xf32>
    %171 = arith.addf %166, %170 : vector<8x1xf32>
    %cst_43 = arith.constant 1.000000e-01 : f32
    %172 = vector.broadcast %cst_43 : f32 to vector<8x1xf32>
    %173 = arith.mulf %172, %171 : vector<8x1xf32>
    %174 = vector.extract_strided_slice %24 {offsets = [0, 256], sizes = [8, 256], strides = [1, 1]} : vector<8x512xf32> to vector<8x256xf32>
    %175 = vector.broadcast %173 : vector<8x1xf32> to vector<8x256xf32>
    %176 = arith.mulf %175, %174 : vector<8x256xf32>
    %177 = vector.extract_strided_slice %69 {offsets = [0, 256], sizes = [1, 256], strides = [1, 1]} : vector<1x512xf32> to vector<1x256xf32>
    %178 = vector.broadcast %177 : vector<1x256xf32> to vector<8x256xf32>
    %179 = arith.mulf %178, %174 : vector<8x256xf32>
    %180 = arith.mulf %176, %179 : vector<8x256xf32>
    %181 = vector.broadcast %2 : vector<8x1xf32> to vector<8x256xf32>
    %182 = arith.mulf %180, %181 : vector<8x256xf32>
    %183 = vector.broadcast %3 : vector<8x1xf32> to vector<8x256xf32>
    %184 = arith.addf %182, %183 : vector<8x256xf32>
    %c1 = arith.constant 1 : index
    %c0_44 = arith.constant 0 : index
    %c0_45 = arith.constant 0 : index
    %185 = vector.load %arg3[%c1, %c0_44, %c0_45] : memref<2x8x256xf32, #tpu.memory_space<vmem>>, vector<1x8x256xf32>
    %186 = vector.shape_cast %185 : vector<1x8x256xf32> to vector<8x256xf32>
    %187 = vector.shape_cast %184 : vector<8x256xf32> to vector<1x8x256xf32>
    tpu.vector_store %arg3[%c1, %c0_44, %c0_45], %187 {strides = array<i32>} : memref<2x8x256xf32, #tpu.memory_space<vmem>>, vector<1x8x256xf32>,
    return
  }
}

</mosaic_0001>

<llo_original>
// kernel: relft_attention_2d.1
$region0: #{relft_attention_2d.1}
  #allocation0 [shape = 'u32[]', space=smem, size = 0x4, offset = 0x4, fixed_abs, tag = 'smem constant byte address 0x4 - core index']
  #allocation1 [shape = 'u32[144,128]{1,0:T(1,128)}', space=vmem, size = 0x12000, scoped, tag = 'internal scratch']
  %s0 = inlined_call_operand.vmem [shape: bf16[108,512], index: 0, kind: input, shape index: {}]
  %s1 = inlined_call_operand.vmem [shape: bf16[24,108], index: 1, kind: input, shape index: {}]
  %s2 = inlined_call_operand.vmem [shape: f32[24,16], index: 2, kind: input, shape index: {}]
  %s3 = inlined_call_operand.vmem [shape: f32[2,8,256], index: 3, kind: output, shape index: {}]
  %s4 = sld [smem:[#allocation0]]
  $region22: #{relft_attention_2d.1} parent=0
    _
  %s6 = ssub.s32 1, %s4
  %s7 = scalar_select 0, %s6, %s4
  // Predicated region
  $region2: #{relft_attention_2d.1} parent=0 // pred_check
    _
  $region3: #{relft_attention_2d.1} parent=0 // pred_check_branch
    %9 = sbr.rel (0) target = $region5
  $region4: #{relft_attention_2d.1} parent=0 // pred_region
    _
  $region5: #{relft_attention_2d.1} parent=0 // pred_fallthru
    _
  // Predicated region
  $region6: #{relft_attention_2d.1} parent=0 // pred_check
    _
  $region7: #{relft_attention_2d.1} parent=0 // pred_check_branch
    %11 = sbr.rel (0) target = $region9
  $region8: #{relft_attention_2d.1} parent=0 // pred_region
    _
  $region9: #{relft_attention_2d.1} parent=0 // pred_fallthru
    _
  // Predicated region
  $region10: #{relft_attention_2d.1} parent=0 // pred_check
    _
  $region11: #{relft_attention_2d.1} parent=0 // pred_check_branch
    %13 = sbr.rel (0) target = $region13
  $region12: #{relft_attention_2d.1} parent=0 // pred_region
    _
  $region13: #{relft_attention_2d.1} parent=0 // pred_fallthru
    _
  %v15 = vld [vmem:[%s2] sm:$0xff]
  %v16 = vld [vmem:[%s2 + $0x8] sm:$0xff]
  %v17 = vld [vmem:[%s2 + $0x10] sm:$0xff]
  %v18 = vld [vmem:[%s1] sm:$0xf]
  %v19 = vld [vmem:[%s1 + $0x4] sm:$0xf]
  %v20 = vld [vmem:[%s1 + $0x8] sm:$0xf]
  %v21 = vld [vmem:[%s0] sm:$0xff]
  %v22 = vld [vmem:[%s0 + $0x8] sm:$0xff]
  %v23 = vld [vmem:[%s0 + $0x10] sm:$0xff]
  %v24 = vld [vmem:[%s0 + $0x18] sm:$0xff]
  %v25 = vld [vmem:[%s0 + $0x20] sm:$0xff]
  %v26 = vld [vmem:[%s0 + $0x28] sm:$0xff]
  %v27 = vld [vmem:[%s0 + $0x30] sm:$0xff]
  %v28 = vld [vmem:[%s0 + $0x38] sm:$0xff]
  %v29 = vld [vmem:[%s0 + $0x40] sm:$0xff]
  %v30 = vld [vmem:[%s0 + $0x48] sm:$0xff]
  %v31 = vld [vmem:[%s0 + $0x50] sm:$0xff]
  %v32 = vld [vmem:[%s0 + $0x58] sm:$0xff]
  %v33 = vld [vmem:[%s0 + $0x60] sm:$0xff]
  %v34 = vld [vmem:[%s0 + $0x68] sm:$0xff]
  %v35 = vld [vmem:[%s0 + $0x70] sm:$0xff]
  %v36 = vld [vmem:[%s0 + $0x78] sm:$0xff]
  %v37 = vld [vmem:[%s0 + $0x80] sm:$0xff]
  %v38 = vld [vmem:[%s0 + $0x88] sm:$0xff]
  %v39 = vld [vmem:[%s0 + $0x90] sm:$0xff]
  %v40 = vld [vmem:[%s0 + $0x98] sm:$0xff]
  %v41 = vld [vmem:[%s0 + $0xa0] sm:$0xff]
  %v42 = vld [vmem:[%s0 + $0xa8] sm:$0xff]
  %v43 = vld [vmem:[%s0 + $0xb0] sm:$0xff]
  %v44 = vld [vmem:[%s0 + $0xb8] sm:$0xff]
  %v45 = vld [vmem:[%s0 + $0xc0] sm:$0xff]
  %v46 = vld [vmem:[%s0 + $0xc8] sm:$0xff]
  %v47 = vld [vmem:[%s0 + $0xd0] sm:$0x33]
  %v48 = vld [vmem:[%s0 + $0xd8] sm:$0x33]
  %50 = vset.pattern.permute.xlu0 0
  %51 = vperm.xlu0 %50, %v15
  %v52 = vpop.permute.xlu0 %51
  %55 = vset.pattern.permute.xlu0 0
  %56 = vperm.xlu0 %55, %v16
  %v57 = vpop.permute.xlu0 %56
  %60 = vset.pattern.permute.xlu0 0
  %61 = vperm.xlu0 %60, %v17
  %v62 = vpop.permute.xlu0 %61
  %v67 = vunpack.c.l.b16 %v18
  %v68 = vunpack.c.l.b16 %v19
  %v69 = vunpack.c.l.b16 %v20
  %v70 = vpack.c.b16 %v68, %v67
  %v71 = vpack.c.b16 %v69, %v69
  %v100 = vunpack.c.l.b16 %v21
  %v101 = vunpack.c.h.b16 %v21
  %v102 = vunpack.c.l.b16 %v22
  %v103 = vunpack.c.h.b16 %v22
  %v104 = vunpack.c.l.b16 %v23
  %v105 = vunpack.c.h.b16 %v23
  %v106 = vunpack.c.l.b16 %v24
  %v107 = vunpack.c.h.b16 %v24
  %v108 = vunpack.c.l.b16 %v25
  %v109 = vunpack.c.h.b16 %v25
  %v110 = vunpack.c.l.b16 %v26
  %v111 = vunpack.c.h.b16 %v26
  %v112 = vunpack.c.l.b16 %v27
  %v113 = vunpack.c.h.b16 %v27
  %v114 = vunpack.c.l.b16 %v28
  %v115 = vunpack.c.h.b16 %v28
  %v116 = vunpack.c.l.b16 %v29
  %v117 = vunpack.c.h.b16 %v29
  %v118 = vunpack.c.l.b16 %v30
  %v119 = vunpack.c.h.b16 %v30
  %v120 = vunpack.c.l.b16 %v31
  %v121 = vunpack.c.h.b16 %v31
  %v122 = vunpack.c.l.b16 %v32
  %v123 = vunpack.c.h.b16 %v32
  %v124 = vunpack.c.l.b16 %v33
  %v125 = vunpack.c.h.b16 %v33
  %v126 = vunpack.c.l.b16 %v34
  %v127 = vunpack.c.h.b16 %v34
  %v128 = vunpack.c.l.b16 %v35
  %v129 = vunpack.c.h.b16 %v35
  %v130 = vunpack.c.l.b16 %v36
  %v131 = vunpack.c.h.b16 %v36
  %v132 = vunpack.c.l.b16 %v37
  %v133 = vunpack.c.h.b16 %v37
  %v134 = vunpack.c.l.b16 %v38
  %v135 = vunpack.c.h.b16 %v38
  %v136 = vunpack.c.l.b16 %v39
  %v137 = vunpack.c.h.b16 %v39
  %v138 = vunpack.c.l.b16 %v40
  %v139 = vunpack.c.h.b16 %v40
  %v140 = vunpack.c.l.b16 %v41
  %v141 = vunpack.c.h.b16 %v41
  %v142 = vunpack.c.l.b16 %v42
  %v143 = vunpack.c.h.b16 %v42
  %v144 = vunpack.c.l.b16 %v43
  %v145 = vunpack.c.h.b16 %v43
  %v146 = vunpack.c.l.b16 %v44
  %v147 = vunpack.c.h.b16 %v44
  %v148 = vunpack.c.l.b16 %v45
  %v149 = vunpack.c.h.b16 %v45
  %v150 = vunpack.c.l.b16 %v46
  %v151 = vunpack.c.h.b16 %v46
  %v152 = vunpack.c.l.b16 %v47
  %v153 = vunpack.c.h.b16 %v47
  %v154 = vunpack.c.l.b16 %v48
  %v155 = vunpack.c.h.b16 %v48
  %v156 = vpack.c.b16 %v104, %v100
  %v157 = vpack.c.b16 %v105, %v101
  %v158 = vpack.c.b16 %v106, %v102
  %v159 = vpack.c.b16 %v107, %v103
  %v160 = vpack.c.b16 %v112, %v108
  %v161 = vpack.c.b16 %v113, %v109
  %v162 = vpack.c.b16 %v114, %v110
  %v163 = vpack.c.b16 %v115, %v111
  %v164 = vpack.c.b16 %v120, %v116
  %v165 = vpack.c.b16 %v121, %v117
  %v166 = vpack.c.b16 %v122, %v118
  %v167 = vpack.c.b16 %v123, %v119
  %v168 = vpack.c.b16 %v128, %v124
  %v169 = vpack.c.b16 %v129, %v125
  %v170 = vpack.c.b16 %v130, %v126
  %v171 = vpack.c.b16 %v131, %v127
  %v172 = vpack.c.b16 %v136, %v132
  %v173 = vpack.c.b16 %v137, %v133
  %v174 = vpack.c.b16 %v138, %v134
  %v175 = vpack.c.b16 %v139, %v135
  %v176 = vpack.c.b16 %v144, %v140
  %v177 = vpack.c.b16 %v145, %v141
  %v178 = vpack.c.b16 %v146, %v142
  %v179 = vpack.c.b16 %v147, %v143
  %v180 = vpack.c.b16 %v152, %v148
  %v181 = vpack.c.b16 %v153, %v149
  %v182 = vpack.c.b16 %v154, %v150
  %v183 = vpack.c.b16 %v155, %v151
  %vm208 = vcmask 883712
  %v210 = vsel %vm208, %v70, 0
  %v213 = vsel %vm208, %v71, 0
  %vm215 = vcmask 1045504
  %v217 = vsel %vm215, %v180, 0
  %v220 = vsel %vm215, %v181, 0
  %v223 = vsel %vm215, %v182, 0
  %v226 = vsel %vm215, %v183, 0
  %228 = vmatprep.subr.bf16.mxu0 0
  %229 = vmatpush1.bf16.msra.mxu0 0
  %230 = vmatprep.subr.bf16.mxu0 %v220
  %231 = vmatpush1.bf16.msra.mxu0 %v217
  %232 = vmatprep.subr.bf16.mxu0 %v177
  %233 = vmatpush1.bf16.msra.mxu0 %v176
  %234 = vmatprep.subr.bf16.mxu0 %v173
  %235 = vmatpush1.bf16.msra.mxu0 %v172
  %236 = vmatprep.subr.bf16.mxu0 %v169
  %237 = vmatpush1.bf16.msra.mxu0 %v168
  %238 = vmatprep.subr.bf16.mxu0 %v165
  %239 = vmatpush1.bf16.msra.mxu0 %v164
  %240 = vmatprep.subr.bf16.mxu0 %v161
  %241 = vmatpush1.bf16.msra.mxu0 %v160
  %242 = vmatprep.subr.bf16.mxu0 %v157
  %243 = vmatpush1.bf16.msra.mxu0 %v156
  %244 = vmatprep.subr.bf16.mxu0 0
  %245 = vmatpush2.bf16.msra.mxu0 0
  %246 = vmatprep.subr.bf16.mxu0 0
  %247 = vmatpush2.bf16.msra.mxu0 0
  %248 = vmatprep.subr.bf16.mxu0 0
  %249 = vmatpush2.bf16.msra.mxu0 0
  %250 = vmatprep.subr.bf16.mxu0 0
  %251 = vmatpush2.bf16.msra.mxu0 0
  %252 = vmatprep.subr.bf16.mxu0 0
  %253 = vmatpush2.bf16.msra.mxu0 0
  %254 = vmatprep.subr.bf16.mxu0 0
  %255 = vmatpush2.bf16.msra.mxu0 0
  %256 = vmatprep.subr.bf16.mxu0 0
  %257 = vmatpush2.bf16.msra.mxu0 0
  %258 = vmatprep.subr.bf16.mxu0 0
  %259 = vmatpush2.bf16.msra.mxu0 0
  %260 = vmatprep.mubr.bf16.mxu0 0
  %261 = vmatmul.mubr.bf16.gmra.mxu0 %v210
  %v262 = vpop.f32.mrf.mxu0
  %v263 = vadd.f32 %v52, %v262
  %v264 = vpop.f32.mrf.mxu0
  %v265 = vadd.f32 %v52, %v264
  %v266 = vpop.f32.mrf.mxu0
  %v267 = vadd.f32 %v57, %v266
  %v268 = vpop.f32.mrf.mxu0
  %v269 = vadd.f32 %v57, %v268
  %270 = vmatprep.mubr.bf16.mxu0 0
  %271 = vmatmul.mubr.bf16.gmra.mxu0 %v213
  %v272 = vpop.f32.mrf.mxu0
  %v273 = vadd.f32 %v62, %v272
  %v274 = vpop.f32.mrf.mxu0
  %v275 = vadd.f32 %v62, %v274
  %v276 = vpop.f32.mrf.mxu0
  %v277 = vpop.f32.mrf.mxu0
  %278 = vdwg.mxu0
  %279 = vmatprep.subr.bf16.mxu0 0
  %280 = vmatpush1.bf16.msra.mxu0 0
  %281 = vmatprep.subr.bf16.mxu0 %v226
  %282 = vmatpush1.bf16.msra.mxu0 %v223
  %283 = vmatprep.subr.bf16.mxu0 %v179
  %284 = vmatpush1.bf16.msra.mxu0 %v178
  %285 = vmatprep.subr.bf16.mxu0 %v175
  %286 = vmatpush1.bf16.msra.mxu0 %v174
  %287 = vmatprep.subr.bf16.mxu0 %v171
  %288 = vmatpush1.bf16.msra.mxu0 %v170
  %289 = vmatprep.subr.bf16.mxu0 %v167
  %290 = vmatpush1.bf16.msra.mxu0 %v166
  %291 = vmatprep.subr.bf16.mxu0 %v163
  %292 = vmatpush1.bf16.msra.mxu0 %v162
  %293 = vmatprep.subr.bf16.mxu0 %v159
  %294 = vmatpush1.bf16.msra.mxu0 %v158
  %295 = vmatprep.subr.bf16.mxu0 0
  %296 = vmatpush2.bf16.msra.mxu0 0
  %297 = vmatprep.subr.bf16.mxu0 0
  %298 = vmatpush2.bf16.msra.mxu0 0
  %299 = vmatprep.subr.bf16.mxu0 0
  %300 = vmatpush2.bf16.msra.mxu0 0
  %301 = vmatprep.subr.bf16.mxu0 0
  %302 = vmatpush2.bf16.msra.mxu0 0
  %303 = vmatprep.subr.bf16.mxu0 0
  %304 = vmatpush2.bf16.msra.mxu0 0
  %305 = vmatprep.subr.bf16.mxu0 0
  %306 = vmatpush2.bf16.msra.mxu0 0
  %307 = vmatprep.subr.bf16.mxu0 0
  %308 = vmatpush2.bf16.msra.mxu0 0
  %309 = vmatprep.subr.bf16.mxu0 0
  %310 = vmatpush2.bf16.msra.mxu0 0
  %311 = vmatprep.mubr.bf16.mxu0 0
  %312 = vmatmul.mubr.bf16.gmra.mxu0 %v210
  %v313 = vpop.f32.mrf.mxu0
  %v314 = vadd.f32 %v52, %v313
  %v315 = vpop.f32.mrf.mxu0
  %v316 = vadd.f32 %v52, %v315
  %v317 = vpop.f32.mrf.mxu0
  %v318 = vadd.f32 %v57, %v317
  %v319 = vpop.f32.mrf.mxu0
  %v320 = vadd.f32 %v57, %v319
  %321 = vmatprep.mubr.bf16.mxu0 0
  %322 = vmatmul.mubr.bf16.gmra.mxu0 %v213
  %v323 = vpop.f32.mrf.mxu0
  %v324 = vadd.f32 %v62, %v323
  %v325 = vpop.f32.mrf.mxu0
  %v326 = vadd.f32 %v62, %v325
  %v327 = vpop.f32.mrf.mxu0
  %v328 = vpop.f32.mrf.mxu0
  %329 = vdwg.mxu0
  %v330 = vmul.f32 %v263, 0.5
  %v331 = vmul.f32 %v265, 0.5
  %v332 = vmul.f32 %v314, 0.5
  %v333 = vmul.f32 %v316, 0.5
  %v334 = vmul.f32 %v267, 0.5
  %v335 = vmul.f32 %v269, 0.5
  %v336 = vmul.f32 %v318, 0.5
  %v337 = vmul.f32 %v320, 0.5
  %v338 = vmul.f32 %v273, 0.5
  %v339 = vmul.f32 %v275, 0.5
  %v340 = vmul.f32 %v324, 0.5
  %v341 = vmul.f32 %v326, 0.5
  %v342 = vtanh.pop %v330
  %v343 = vtanh.pop %v331
  %v344 = vtanh.pop %v332
  %v345 = vtanh.pop %v333
  %v346 = vtanh.pop %v334
  %v347 = vtanh.pop %v335
  %v348 = vtanh.pop %v336
  %v349 = vtanh.pop %v337
  %v350 = vtanh.pop %v338
  %v351 = vtanh.pop %v339
  %v352 = vtanh.pop %v340
  %v353 = vtanh.pop %v341
  %v354 = vadd.f32 %v342, 1.0
  %v355 = vadd.f32 %v343, 1.0
  %v356 = vadd.f32 %v344, 1.0
  %v357 = vadd.f32 %v345, 1.0
  %v358 = vadd.f32 %v346, 1.0
  %v359 = vadd.f32 %v347, 1.0
  %v360 = vadd.f32 %v348, 1.0
  %v361 = vadd.f32 %v349, 1.0
  %v362 = vadd.f32 %v350, 1.0
  %v363 = vadd.f32 %v351, 1.0
  %v364 = vadd.f32 %v352, 1.0
  %v365 = vadd.f32 %v353, 1.0
  %v366 = vmul.f32 %v354, 0.5
  %v367 = vmul.f32 %v355, 0.5
  %v368 = vmul.f32 %v356, 0.5
  %v369 = vmul.f32 %v357, 0.5
  %v370 = vmul.f32 %v358, 0.5
  %v371 = vmul.f32 %v359, 0.5
  %v372 = vmul.f32 %v360, 0.5
  %v373 = vmul.f32 %v361, 0.5
  %v374 = vmul.f32 %v362, 0.5
  %v375 = vmul.f32 %v363, 0.5
  %v376 = vmul.f32 %v364, 0.5
  %v377 = vmul.f32 %v365, 0.5
  %v378 = vmul.f32 %v366, %v370
  %v379 = vmul.f32 %v367, %v371
  %v380 = vmul.f32 %v368, %v372
  %v381 = vmul.f32 %v369, %v373
  %v382 = vmul.f32 %v366, %v366
  %v383 = vmul.f32 %v367, %v367
  %v384 = vmul.f32 %v368, %v368
  %v385 = vmul.f32 %v369, %v369
  %v386 = vmul.f32 %v370, %v370
  %v387 = vmul.f32 %v371, %v371
  %v388 = vmul.f32 %v372, %v372
  %v389 = vmul.f32 %v373, %v373
  %v390 = vadd.f32 %v382, %v386
  %v391 = vadd.f32 %v383, %v387
  %v392 = vadd.f32 %v384, %v388
  %v393 = vadd.f32 %v385, %v389
  %v394 = vrot.slane %v378, 4
  %v395 = vadd.f32 %v378, %v394
  %v396 = vrot.slane %v395, 2
  %v397 = vadd.f32 %v395, %v396
  %v398 = vrot.slane %v397, 1
  %v399 = vadd.f32 %v397, %v398
  %v400 = vrot.slane %v379, 4
  %v401 = vadd.f32 %v379, %v400
  %v402 = vrot.slane %v401, 2
  %v403 = vadd.f32 %v401, %v402
  %v404 = vrot.slane %v403, 1
  %v405 = vadd.f32 %v403, %v404
  %v406 = vrot.slane %v380, 4
  %v407 = vadd.f32 %v380, %v406
  %v408 = vrot.slane %v407, 2
  %v409 = vadd.f32 %v407, %v408
  %v410 = vrot.slane %v409, 1
  %v411 = vadd.f32 %v409, %v410
  %v412 = vrot.slane %v381, 4
  %v413 = vadd.f32 %v381, %v412
  %v414 = vrot.slane %v413, 2
  %v415 = vadd.f32 %v413, %v414
  %v416 = vrot.slane %v415, 1
  %v417 = vadd.f32 %v415, %v416
  %v418 = vrot.slane %v390, 4
  %v419 = vadd.f32 %v390, %v418
  %v420 = vrot.slane %v419, 2
  %v421 = vadd.f32 %v419, %v420
  %v422 = vrot.slane %v421, 1
  %v423 = vadd.f32 %v421, %v422
  %v424 = vrot.slane %v391, 4
  %v425 = vadd.f32 %v391, %v424
  %v426 = vrot.slane %v425, 2
  %v427 = vadd.f32 %v425, %v426
  %v428 = vrot.slane %v427, 1
  %v429 = vadd.f32 %v427, %v428
  %v430 = vrot.slane %v392, 4
  %v431 = vadd.f32 %v392, %v430
  %v432 = vrot.slane %v431, 2
  %v433 = vadd.f32 %v431, %v432
  %v434 = vrot.slane %v433, 1
  %v435 = vadd.f32 %v433, %v434
  %v436 = vrot.slane %v393, 4
  %v437 = vadd.f32 %v393, %v436
  %v438 = vrot.slane %v437, 2
  %v439 = vadd.f32 %v437, %v438
  %v440 = vrot.slane %v439, 1
  %v441 = vadd.f32 %v439, %v440
  %v442 = vrot.slane %v366, 4
  %v443 = vadd.f32 %v366, %v442
  %v444 = vrot.slane %v443, 2
  %v445 = vadd.f32 %v443, %v444
  %v446 = vrot.slane %v445, 1
  %v447 = vadd.f32 %v445, %v446
  %v448 = vrot.slane %v367, 4
  %v449 = vadd.f32 %v367, %v448
  %v450 = vrot.slane %v449, 2
  %v451 = vadd.f32 %v449, %v450
  %v452 = vrot.slane %v451, 1
  %v453 = vadd.f32 %v451, %v452
  %v454 = vrot.slane %v368, 4
  %v455 = vadd.f32 %v368, %v454
  %v456 = vrot.slane %v455, 2
  %v457 = vadd.f32 %v455, %v456
  %v458 = vrot.slane %v457, 1
  %v459 = vadd.f32 %v457, %v458
  %v460 = vrot.slane %v369, 4
  %v461 = vadd.f32 %v369, %v460
  %v462 = vrot.slane %v461, 2
  %v463 = vadd.f32 %v461, %v462
  %v464 = vrot.slane %v463, 1
  %v465 = vadd.f32 %v463, %v464
  %v466 = vsub.f32 8.0, %v447
  %v467 = vsub.f32 8.0, %v453
  %v468 = vsub.f32 8.0, %v459
  %v469 = vsub.f32 8.0, %v465
  %v470 = vrot.slane %v370, 4
  %v471 = vadd.f32 %v370, %v470
  %v472 = vrot.slane %v471, 2
  %v473 = vadd.f32 %v471, %v472
  %v474 = vrot.slane %v473, 1
  %v475 = vadd.f32 %v473, %v474
  %v476 = vrot.slane %v371, 4
  %v477 = vadd.f32 %v371, %v476
  %v478 = vrot.slane %v477, 2
  %v479 = vadd.f32 %v477, %v478
  %v480 = vrot.slane %v479, 1
  %v481 = vadd.f32 %v479, %v480
  %v482 = vrot.slane %v372, 4
  %v483 = vadd.f32 %v372, %v482
  %v484 = vrot.slane %v483, 2
  %v485 = vadd.f32 %v483, %v484
  %v486 = vrot.slane %v485, 1
  %v487 = vadd.f32 %v485, %v486
  %v488 = vrot.slane %v373, 4
  %v489 = vadd.f32 %v373, %v488
  %v490 = vrot.slane %v489, 2
  %v491 = vadd.f32 %v489, %v490
  %v492 = vrot.slane %v491, 1
  %v493 = vadd.f32 %v491, %v492
  %v494 = vsub.f32 %v466, %v475
  %v495 = vsub.f32 %v467, %v481
  %v496 = vsub.f32 %v468, %v487
  %v497 = vsub.f32 %v469, %v493
  %498 = vset.pattern.permute.xlu0 3
  %499 = vperm.xlu0 %498, %v15
  %v500 = vpop.permute.xlu0 %499
  %502 = vset.pattern.permute.xlu0 3
  %503 = vperm.xlu0 %502, %v16
  %v504 = vpop.permute.xlu0 %503
  %v506 = vmul.f32 %v500, %v423
  %v507 = vmul.f32 %v500, %v429
  %v508 = vmul.f32 %v500, %v435
  %v509 = vmul.f32 %v500, %v441
  %v510 = vmul.f32 %v504, %v423
  %v511 = vmul.f32 %v504, %v429
  %v512 = vmul.f32 %v504, %v435
  %v513 = vmul.f32 %v504, %v441
  %514 = vset.pattern.permute.xlu0 4
  %515 = vperm.xlu0 %514, %v15
  %v516 = vpop.permute.xlu0 %515
  %518 = vset.pattern.permute.xlu0 4
  %519 = vperm.xlu0 %518, %v16
  %v520 = vpop.permute.xlu0 %519
  %v522 = vmul.f32 %v516, %v399
  %v523 = vmul.f32 %v516, %v405
  %v524 = vmul.f32 %v516, %v411
  %v525 = vmul.f32 %v516, %v417
  %v526 = vmul.f32 %v520, %v399
  %v527 = vmul.f32 %v520, %v405
  %v528 = vmul.f32 %v520, %v411
  %v529 = vmul.f32 %v520, %v417
  %v530 = vadd.f32 %v506, %v522
  %v531 = vadd.f32 %v507, %v523
  %v532 = vadd.f32 %v508, %v524
  %v533 = vadd.f32 %v509, %v525
  %v534 = vadd.f32 %v510, %v526
  %v535 = vadd.f32 %v511, %v527
  %v536 = vadd.f32 %v512, %v528
  %v537 = vadd.f32 %v513, %v529
  %538 = vset.pattern.permute.xlu0 5
  %539 = vperm.xlu0 %538, %v15
  %v540 = vpop.permute.xlu0 %539
  %542 = vset.pattern.permute.xlu0 5
  %543 = vperm.xlu0 %542, %v16
  %v544 = vpop.permute.xlu0 %543
  %v546 = vmul.f32 %v540, %v494
  %v547 = vmul.f32 %v540, %v495
  %v548 = vmul.f32 %v540, %v496
  %v549 = vmul.f32 %v540, %v497
  %v550 = vmul.f32 %v544, %v494
  %v551 = vmul.f32 %v544, %v495
  %v552 = vmul.f32 %v544, %v496
  %v553 = vmul.f32 %v544, %v497
  %v554 = vadd.f32 %v530, %v546
  %v555 = vadd.f32 %v531, %v547
  %v556 = vadd.f32 %v532, %v548
  %v557 = vadd.f32 %v533, %v549
  %v558 = vadd.f32 %v534, %v550
  %v559 = vadd.f32 %v535, %v551
  %v560 = vadd.f32 %v536, %v552
  %v561 = vadd.f32 %v537, %v553
  %v562 = vadd.f32 %v554, 1e-05
  %v563 = vadd.f32 %v555, 1e-05
  %v564 = vadd.f32 %v556, 1e-05
  %v565 = vadd.f32 %v557, 1e-05
  %v566 = vadd.f32 %v558, 1e-05
  %v567 = vadd.f32 %v559, 1e-05
  %v568 = vadd.f32 %v560, 1e-05
  %v569 = vadd.f32 %v561, 1e-05
  %v570 = vrcp.pop %v562
  %v571 = vrcp.pop %v563
  %v572 = vrcp.pop %v564
  %v573 = vrcp.pop %v565
  %v574 = vrcp.pop %v566
  %v575 = vrcp.pop %v567
  %v576 = vrcp.pop %v568
  %v577 = vrcp.pop %v569
  %vm578 = vcmask 1044480
  %v579 = vsel %vm578, %v570, 0.0
  %v580 = vrot.slane %v579, 4
  %v581 = vadd.f32 %v579, %v580
  %v582 = vrot.slane %v581, 2
  %v583 = vadd.f32 %v581, %v582
  %v584 = vrot.slane %v583, 1
  %v585 = vadd.f32 %v583, %v584
  %v586 = vsel %vm578, %v571, 0.0
  %v587 = vrot.slane %v586, 4
  %v588 = vadd.f32 %v586, %v587
  %v589 = vrot.slane %v588, 2
  %v590 = vadd.f32 %v588, %v589
  %v591 = vrot.slane %v590, 1
  %v592 = vadd.f32 %v590, %v591
  %v593 = vsel %vm578, %v572, 0.0
  %v594 = vrot.slane %v593, 4
  %v595 = vadd.f32 %v593, %v594
  %v596 = vrot.slane %v595, 2
  %v597 = vadd.f32 %v595, %v596
  %v598 = vrot.slane %v597, 1
  %v599 = vadd.f32 %v597, %v598
  %v600 = vsel %vm578, %v573, 0.0
  %v601 = vrot.slane %v600, 4
  %v602 = vadd.f32 %v600, %v601
  %v603 = vrot.slane %v602, 2
  %v604 = vadd.f32 %v602, %v603
  %v605 = vrot.slane %v604, 1
  %v606 = vadd.f32 %v604, %v605
  %vm615 = vcmask 1042432
  %v616 = vrot.slane %v570, 5
  %v617 = vrot.slane %v574, 5
  %v618 = vsel %vm615, %v616, %v617
  %v619 = vrot.slane %v571, 5
  %v620 = vrot.slane %v575, 5
  %v621 = vsel %vm615, %v619, %v620
  %v622 = vrot.slane %v572, 5
  %v623 = vrot.slane %v576, 5
  %v624 = vsel %vm615, %v622, %v623
  %v625 = vrot.slane %v573, 5
  %v626 = vrot.slane %v577, 5
  %v627 = vsel %vm615, %v625, %v626
  %v632 = vsel %vm578, %v618, 0.0
  %v633 = vrot.slane %v632, 4
  %v634 = vadd.f32 %v632, %v633
  %v635 = vrot.slane %v634, 2
  %v636 = vadd.f32 %v634, %v635
  %v637 = vrot.slane %v636, 1
  %v638 = vadd.f32 %v636, %v637
  %v639 = vsel %vm578, %v621, 0.0
  %v640 = vrot.slane %v639, 4
  %v641 = vadd.f32 %v639, %v640
  %v642 = vrot.slane %v641, 2
  %v643 = vadd.f32 %v641, %v642
  %v644 = vrot.slane %v643, 1
  %v645 = vadd.f32 %v643, %v644
  %v646 = vsel %vm578, %v624, 0.0
  %v647 = vrot.slane %v646, 4
  %v648 = vadd.f32 %v646, %v647
  %v649 = vrot.slane %v648, 2
  %v650 = vadd.f32 %v648, %v649
  %v651 = vrot.slane %v650, 1
  %v652 = vadd.f32 %v650, %v651
  %v653 = vsel %vm578, %v627, 0.0
  %v654 = vrot.slane %v653, 4
  %v655 = vadd.f32 %v653, %v654
  %v656 = vrot.slane %v655, 2
  %v657 = vadd.f32 %v655, %v656
  %v658 = vrot.slane %v657, 1
  %v659 = vadd.f32 %v657, %v658
  %v660 = vadd.f32 %v399, 1e-05
  %v661 = vadd.f32 %v405, 1e-05
  %v662 = vadd.f32 %v411, 1e-05
  %v663 = vadd.f32 %v417, 1e-05
  %v664 = vmul.f32 %v660, %v585
  %v665 = vmul.f32 %v661, %v592
  %v666 = vmul.f32 %v662, %v599
  %v667 = vmul.f32 %v663, %v606
  %v668 = vadd.f32 %v399, %v494
  %v669 = vadd.f32 %v405, %v495
  %v670 = vadd.f32 %v411, %v496
  %v671 = vadd.f32 %v417, %v497
  %v672 = vadd.f32 %v668, 1e-05
  %v673 = vadd.f32 %v669, 1e-05
  %v674 = vadd.f32 %v670, 1e-05
  %v675 = vadd.f32 %v671, 1e-05
  %v676 = vmul.f32 %v672, %v638
  %v677 = vmul.f32 %v673, %v645
  %v678 = vmul.f32 %v674, %v652
  %v679 = vmul.f32 %v675, %v659
  %v680 = vadd.f32 %v664, %v676
  %v681 = vadd.f32 %v665, %v677
  %v682 = vadd.f32 %v666, %v678
  %v683 = vadd.f32 %v667, %v679
  %v684 = vmul.f32 %v680, 0.1
  %v685 = vmul.f32 %v681, 0.1
  %v686 = vmul.f32 %v682, 0.1
  %v687 = vmul.f32 %v683, 0.1
  %v688 = vadd.f32 %v378, %v379
  %689 = vadd.xlane.f32.xlu0 %v688
  %v690 = vpop.xlane.xlu0 %689
  %v691 = vadd.f32 %v390, %v391
  %692 = vadd.xlane.f32.xlu0 %v691
  %v693 = vpop.xlane.xlu0 %692
  %v694 = vadd.f32 %v366, %v367
  %695 = vadd.xlane.f32.xlu0 %v694
  %v696 = vpop.xlane.xlu0 %695
  %v697 = vsub.f32 256.0, %v696
  %v698 = vadd.f32 %v370, %v371
  %699 = vadd.xlane.f32.xlu0 %v698
  %v700 = vpop.xlane.xlu0 %699
  %v701 = vsub.f32 %v697, %v700
  %v702 = vlaneseq
  %v703 = vshrl.u32 %v702, 7
  %v704 = vsub.s32 2, %v703
  %v705 = vrot.slane %v16, %v704
  %v706 = vmul.f32 %v705, %v693
  %v707 = vlaneseq
  %v708 = vshrl.u32 %v707, 7
  %v709 = vsub.s32 3, %v708
  %v710 = vrot.slane %v16, %v709
  %v711 = vmul.f32 %v710, %v690
  %v712 = vadd.f32 %v706, %v711
  %v713 = vlaneseq
  %v714 = vshrl.u32 %v713, 7
  %v715 = vsub.s32 4, %v714
  %v716 = vrot.slane %v16, %v715
  %v717 = vmul.f32 %v716, %v701
  %v718 = vadd.f32 %v712, %v717
  %v719 = vadd.f32 %v718, 1e-05
  %v720 = vrcp.pop %v719
  %722 = vrot.lane.b32.xlu0 %v720, 122
  %v723 = vpop.permute.xlu0 %722
  %vm725 = vcmask 39936
  %v726 = vsel %vm725, %v723, 0.0
  %727 = vadd.xlane.f32.xlu0 %v726
  %v728 = vpop.xlane.xlu0 %727
  %729 = vrot.lane.b32.xlu0 %v720, 117
  %v730 = vpop.permute.xlu0 %729
  %v732 = vsel %vm725, %v730, 0.0
  %733 = vadd.xlane.f32.xlu0 %v732
  %v734 = vpop.xlane.xlu0 %733
  %v735 = vadd.f32 %v690, 1e-05
  %v736 = vmul.f32 %v735, %v728
  %v737 = vadd.f32 %v690, %v701
  %v738 = vadd.f32 %v737, 1e-05
  %v739 = vmul.f32 %v738, %v734
  %v740 = vadd.f32 %v736, %v739
  %v741 = vmul.f32 %v740, 0.1
  %v742 = vmul.f32 %v741, %v374
  %v743 = vmul.f32 %v741, %v375
  %v744 = vmul.f32 %v684, %v374
  %v745 = vmul.f32 %v685, %v375
  %v746 = vmul.f32 %v742, %v744
  %v747 = vmul.f32 %v743, %v745
  %748 = vset.pattern.permute.xlu0 1
  %749 = vperm.xlu0 %748, %v15
  %v750 = vpop.permute.xlu0 %749
  %v752 = vmul.f32 %v746, %v750
  %v753 = vmul.f32 %v747, %v750
  %754 = vset.pattern.permute.xlu0 2
  %755 = vperm.xlu0 %754, %v15
  %v756 = vpop.permute.xlu0 %755
  %v758 = vadd.f32 %v752, %v756
  %v759 = vadd.f32 %v753, %v756
  %760 = vst [vmem:[%s3] sm:$0xff] %v758
  %761 = vst [vmem:[%s3 + $0x8] sm:$0xff] %v759
  %v762 = vadd.f32 %v380, %v381
  %763 = vadd.xlane.f32.xlu0 %v762
  %v764 = vpop.xlane.xlu0 %763
  %v765 = vadd.f32 %v392, %v393
  %766 = vadd.xlane.f32.xlu0 %v765
  %v767 = vpop.xlane.xlu0 %766
  %v768 = vadd.f32 %v368, %v369
  %769 = vadd.xlane.f32.xlu0 %v768
  %v770 = vpop.xlane.xlu0 %769
  %v771 = vsub.f32 256.0, %v770
  %v772 = vadd.f32 %v372, %v373
  %773 = vadd.xlane.f32.xlu0 %v772
  %v774 = vpop.xlane.xlu0 %773
  %v775 = vsub.f32 %v771, %v774
  %v776 = vmul.f32 %v705, %v767
  %v777 = vmul.f32 %v710, %v764
  %v778 = vadd.f32 %v776, %v777
  %v779 = vmul.f32 %v716, %v775
  %v780 = vadd.f32 %v778, %v779
  %v781 = vadd.f32 %v780, 1e-05
  %v782 = vrcp.pop %v781
  %784 = vrot.lane.b32.xlu0 %v782, 122
  %v785 = vpop.permute.xlu0 %784
  %v787 = vsel %vm725, %v785, 0.0
  %788 = vadd.xlane.f32.xlu0 %v787
  %v789 = vpop.xlane.xlu0 %788
  %790 = vrot.lane.b32.xlu0 %v782, 117
  %v791 = vpop.permute.xlu0 %790
  %v793 = vsel %vm725, %v791, 0.0
  %794 = vadd.xlane.f32.xlu0 %v793
  %v795 = vpop.xlane.xlu0 %794
  %v796 = vadd.f32 %v764, 1e-05
  %v797 = vmul.f32 %v796, %v789
  %v798 = vadd.f32 %v764, %v775
  %v799 = vadd.f32 %v798, 1e-05
  %v800 = vmul.f32 %v799, %v795
  %v801 = vadd.f32 %v797, %v800
  %v802 = vmul.f32 %v801, 0.1
  %v803 = vmul.f32 %v802, %v376
  %v804 = vmul.f32 %v802, %v377
  %v805 = vmul.f32 %v686, %v376
  %v806 = vmul.f32 %v687, %v377
  %v807 = vmul.f32 %v803, %v805
  %v808 = vmul.f32 %v804, %v806
  %v809 = vmul.f32 %v807, %v750
  %v810 = vmul.f32 %v808, %v750
  %v811 = vadd.f32 %v809, %v756
  %v812 = vadd.f32 %v810, %v756
  %s813 = scalar_lea.vmem %s3, 16
  %814 = vst [vmem:[%s813] sm:$0xff] %v811
  %815 = vst [vmem:[%s813 + $0x8] sm:$0xff] %v812
  // Predicated region
  $region14: #{relft_attention_2d.1} parent=0 // pred_check
    _
  $region15: #{relft_attention_2d.1} parent=0 // pred_check_branch
    %817 = sbr.rel (0) target = $region17
  $region16: #{relft_attention_2d.1} parent=0 // pred_region
    _
  $region17: #{relft_attention_2d.1} parent=0 // pred_fallthru
    _
  // Predicated region
  $region18: #{relft_attention_2d.1} parent=0 // pred_check
    _
  $region19: #{relft_attention_2d.1} parent=0 // pred_check_branch
    %819 = sbr.rel (0) target = $region21
  $region20: #{relft_attention_2d.1} parent=0 // pred_region
    _
  $region21: #{relft_attention_2d.1} parent=0 // pred_fallthru
    _

</llo_original>
